<compile_context>
chip_gen: v6e
topology: v6e:2x2x1
jax: 0.10.0
libtpu: 0.0.40
codegen_flags: <defaults>
</compile_context>

<pallas_src>
import functools

import jax
import jax.numpy as jnp
from jax.experimental import pallas as pl
from jax.experimental.pallas import tpu as pltpu

NEG_SLOPE = 0.01  # nn.LeakyReLU() default negative_slope


def _leaky_relu(h):
    return jnp.where(h > 0, h, NEG_SLOPE * h)


def _mlp_kernel(x_ref,
                w1_ref, b1_ref,
                w2_ref, b2_ref,
                w3_ref, b3_ref,
                w4_ref, b4_ref,
                o_ref, *, chunk_b):
    """x_ref: [in_dim, TILE_B] (features on sublanes, batch on lanes).
    o_ref: [out_dim, TILE_B].  The lane (batch) axis is processed in
    chunk_b-wide pieces to bound live activation footprint at large TILE_B."""
    in_dim, tile_b = x_ref.shape

    cb = chunk_b if (chunk_b <= tile_b and tile_b % chunk_b == 0) else tile_b
    n_chunks = tile_b // cb

    # Weights / biases are tiny, VMEM-resident (constant index_map): load once.
    w1 = w1_ref[...].astype(jnp.float32)            # [16, in_dim]  VPU path, f32
    b1 = b1_ref[...].astype(jnp.float32)
    w2 = w2_ref[...]                                # native dtype -> MXU directly
    b2 = b2_ref[...].astype(jnp.float32)
    w3 = w3_ref[...]
    b3 = b3_ref[...].astype(jnp.float32)
    w4 = w4_ref[...]
    b4 = b4_ref[...].astype(jnp.float32)

    # Statically unrolled chunk loop (== lax.fori_loop(..., unroll=True) with
    # compile-time offsets); static lane slices lower to plain aligned vld/vst.
    for c in range(n_chunks):
        off = c * cb
        x = x_ref[:, off:off + cb].astype(jnp.float32)        # [in_dim, cb]

        # ---- Layer 1: K = in_dim (=2) -> VPU broadcast multiply-adds -------
        acc = w1[:, 0:1] * x[0:1, :]                          # [16,1]*[1,cb]
        for k in range(1, in_dim):                            # static tiny loop
            acc = acc + w1[:, k:k + 1] * x[k:k + 1, :]
        h = _leaky_relu(acc + b1)

        # ---- Layers 2-4: MXU matmuls, lane-dense N = cb, f32 accumulation --
        h = jnp.dot(w2, h.astype(w2.dtype), preferred_element_type=jnp.float32) + b2
        h = _leaky_relu(h)
        h = jnp.dot(w3, h.astype(w3.dtype), preferred_element_type=jnp.float32) + b3
        h = _leaky_relu(h)
        h = jnp.dot(w4, h.astype(w4.dtype), preferred_element_type=jnp.float32) + b4

        o_ref[:, off:off + cb] = h.astype(o_ref.dtype)        # [out_dim, cb]


def pca_to_latent_forward_t(xt, params, *, tile_b=32768, chunk_b=2048,
                            out_dtype=jnp.float32,
                            vmem_limit_bytes=48 * 1024 * 1024):
    """Lane-dense path: xt [in_dim, B] -> [out_dim, B].
    Prefer this API in performance-critical callers (no wrapper transposes)."""
    in_dim, B = xt.shape
    out_dim = params["w4"].shape[0]

    # Lane-multiple tile; never pad more than one tile past B.
    tile_b = max(128, (tile_b // 128) * 128)
    tile_b = min(tile_b, pl.cdiv(B, 128) * 128)
    b_pad = pl.cdiv(B, tile_b) * tile_b
    if b_pad != B:
        xt = jnp.pad(xt, ((0, 0), (0, b_pad - B)))

    grid = (b_pad // tile_b,)

    args = (xt,
            params["w1"], params["b1"],
            params["w2"], params["b2"],
            params["w3"], params["b3"],
            params["w4"], params["b4"])

    # x / out tiled along the lane (batch) axis -> auto double-buffered DMAs;
    # weights / biases use constant index_maps -> VMEM-resident across steps.
    in_specs = [pl.BlockSpec((in_dim, tile_b), lambda i: (0, i))]
    in_specs += [pl.BlockSpec(a.shape, lambda i: (0, 0)) for a in args[1:]]
    out_spec = pl.BlockSpec((out_dim, tile_b), lambda i: (0, i))

    x_bytes = jnp.dtype(xt.dtype).itemsize
    o_bytes = jnp.dtype(out_dtype).itemsize
    flops = 2 * b_pad * (in_dim * 16 + 16 * 32 + 32 * 16 + 16 * out_dim)
    bytes_io = b_pad * (in_dim * x_bytes + out_dim * o_bytes)
    bytes_w = sum(int(a.size) * jnp.dtype(a.dtype).itemsize for a in args[1:])

    kernel = functools.partial(_mlp_kernel, chunk_b=chunk_b)

    out_t = pl.pallas_call(
        kernel,
        out_shape=jax.ShapeDtypeStruct((out_dim, b_pad), out_dtype),
        grid=grid,
        in_specs=in_specs,
        out_specs=out_spec,
        compiler_params=pltpu.CompilerParams(
            # TODO(synk): on v7x verify "parallel" actually shards the batch
            # grid across both TensorCores; if not, switch to
            # pltpu.CORE_PARALLEL (or an explicit leading grid axis of 2).
            dimension_semantics=("parallel",),
            # 48 MiB fits v7x's 64 MiB/TC; v5e/v6e (128 MiB) can raise this
            # and push tile_b toward ~128K.
            vmem_limit_bytes=vmem_limit_bytes,
        ),
        cost_estimate=pl.CostEstimate(
            flops=flops,
            transcendentals=0,
            bytes_accessed=bytes_io + bytes_w,
        ),
    )(*args)

    if b_pad != B:
        out_t = out_t[:, :B]
    return out_t


def pca_to_latent_forward(x, params, *, tile_b=32768, chunk_b=2048,
                          io_dtype=jnp.float32, out_dtype=jnp.float32,
                          small_batch_fallback=True,
                          vmem_limit_bytes=48 * 1024 * 1024):
    """Batch-major convenience wrapper: x [B, in_dim] -> [B, out_dim] f32/bf16.

    io_dtype=bfloat16 thins x / weight traffic; out_dtype=bfloat16 thins the
    output write (the dominant 32 of ~40 kernel bytes/element) -- both at
    ~1e-2 rel tolerance vs the f32 reference (accumulation stays f32).
    Wrap the whole call in jax.jit so the pad / slice / transposes fuse."""
    B = x.shape[0]

    # Small batches: fixed pallas_call + wrapper transpose cost dominates.
    if small_batch_fallback and B < max(2 * tile_b, 4096):
        return reference_forward(x, params).astype(out_dtype)

    xt = jnp.asarray(x, io_dtype).T                       # [in_dim, B]
    p = {}
    for i in range(1, 5):
        p[f"w{i}"] = jnp.asarray(params[f"w{i}"], io_dtype)
        p[f"b{i}"] = jnp.asarray(params[f"b{i}"], jnp.float32)  # biases stay f32

    out_t = pca_to_latent_forward_t(
        xt, p, tile_b=tile_b, chunk_b=chunk_b, out_dtype=out_dtype,
        vmem_limit_bytes=vmem_limit_bytes)

    # NOTE: this transpose is the largest remaining extra HBM cost; prefer
    # pca_to_latent_forward_t (lane-dense layout end-to-end) when possible.
    return out_t.T


def init_params(key, input_dim=2, output_dim=8):
    """PyTorch nn.Linear-style init: uniform(-1/sqrt(fan_in), 1/sqrt(fan_in)).
    Weights in PyTorch orientation [out, in]; biases as [out, 1]."""
    dims = [input_dim, 16, 32, 16, output_dim]
    params = {}
    for i in range(4):
        fan_in, fan_out = dims[i], dims[i + 1]
        key, kw, kb = jax.random.split(key, 3)
        bound = 1.0 / jnp.sqrt(jnp.float32(fan_in))
        params[f"w{i+1}"] = jax.random.uniform(
            kw, (fan_out, fan_in), jnp.float32, -bound, bound)
        params[f"b{i+1}"] = jax.random.uniform(
            kb, (fan_out, 1), jnp.float32, -bound, bound)
    return params


def reference_forward(x, params):
    h = x
    for i in range(1, 5):
        w, b = params[f"w{i}"], params[f"b{i}"]
        h = h @ w.T + b[:, 0]
        if i < 4:
            h = jnp.where(h > 0, h, NEG_SLOPE * h)
    return h


if __name__ == "__main__":
    key = jax.random.PRNGKey(0)
    kp, kx = jax.random.split(key)

    input_dim, output_dim = 2, 8
    batch = 1000  # small, non-multiple of the tile: exercises pad + slice

    params = init_params(kp, input_dim=input_dim, output_dim=output_dim)
    x = jax.random.normal(kx, (batch, input_dim), dtype=jnp.float32)

    # Small tile for the small demo batch (production defaults: tile_b=32768,
    # chunk_b=2048 for large B).  Fallback disabled to force the Pallas path.
    fwd = jax.jit(functools.partial(
        pca_to_latent_forward, tile_b=512, chunk_b=256,
        small_batch_fallback=False))

    out = jax.block_until_ready(fwd(x, params))
    ref = reference_forward(x, params)
    assert out.shape == (batch, output_dim)
    assert jnp.allclose(out, ref, atol=1e-5, rtol=1e-5), float(
        jnp.max(jnp.abs(out - ref)))

    # Also exercise the lane-dense API directly (no wrapper transposes).
    out_t = jax.block_until_ready(
        pca_to_latent_forward_t(x.T, params, tile_b=512, chunk_b=256))
    assert jnp.allclose(out_t.T, ref, atol=1e-5, rtol=1e-5)

    # TODO(synk): io_dtype/out_dtype = bfloat16 cuts kernel HBM traffic ~40%
    # on this mem-bound kernel but loosens agreement with the f32 reference
    # to ~1e-2 rel, so the demo keeps f32.
    print("KERNEL_OK")
</pallas_src>

<mosaic_0001>
module attributes {stable_mosaic.version = 11 : i64} {
  func.func @_mlp_kernel(%arg0: i32, %arg1: memref<2x512xf32, #tpu.memory_space<vmem>>, %arg2: memref<16x2xf32, #tpu.memory_space<vmem>>, %arg3: memref<16x1xf32, #tpu.memory_space<vmem>>, %arg4: memref<32x16xf32, #tpu.memory_space<vmem>>, %arg5: memref<32x1xf32, #tpu.memory_space<vmem>>, %arg6: memref<16x32xf32, #tpu.memory_space<vmem>>, %arg7: memref<16x1xf32, #tpu.memory_space<vmem>>, %arg8: memref<8x16xf32, #tpu.memory_space<vmem>>, %arg9: memref<8x1xf32, #tpu.memory_space<vmem>>, %arg10: memref<8x512xf32, #tpu.memory_space<vmem>>) attributes {dimension_semantics = [#tpu.dimension_semantics<parallel>], iteration_bounds = array<i64: 2>, scalar_prefetch = 0 : i64, scratch_operands = 0 : i64, tpu.core_type = #tpu.core_type<tc>, window_params = [{transform_indices = @transform_0, window_bounds = array<i64: 2, 512>}, {pipeline_mode = #tpu.pipeline_mode<synchronous>, transform_indices = @transform_1, window_bounds = array<i64: 16, 2>}, {pipeline_mode = #tpu.pipeline_mode<synchronous>, transform_indices = @transform_2, window_bounds = array<i64: 16, 1>}, {pipeline_mode = #tpu.pipeline_mode<synchronous>, transform_indices = @transform_3, window_bounds = array<i64: 32, 16>}, {pipeline_mode = #tpu.pipeline_mode<synchronous>, transform_indices = @transform_4, window_bounds = array<i64: 32, 1>}, {pipeline_mode = #tpu.pipeline_mode<synchronous>, transform_indices = @transform_5, window_bounds = array<i64: 16, 32>}, {pipeline_mode = #tpu.pipeline_mode<synchronous>, transform_indices = @transform_6, window_bounds = array<i64: 16, 1>}, {pipeline_mode = #tpu.pipeline_mode<synchronous>, transform_indices = @transform_7, window_bounds = array<i64: 8, 16>}, {pipeline_mode = #tpu.pipeline_mode<synchronous>, transform_indices = @transform_8, window_bounds = array<i64: 8, 1>}, {transform_indices = @transform_9, window_bounds = array<i64: 8, 512>}]} {
    %c0 = arith.constant 0 : index
    %c0_0 = arith.constant 0 : index
    %0 = vector.load %arg2[%c0, %c0_0] : memref<16x2xf32, #tpu.memory_space<vmem>>, vector<16x2xf32>
    %c0_1 = arith.constant 0 : index
    %c0_2 = arith.constant 0 : index
    %1 = vector.load %arg3[%c0_1, %c0_2] : memref<16x1xf32, #tpu.memory_space<vmem>>, vector<16x1xf32>
    %c0_3 = arith.constant 0 : index
    %c0_4 = arith.constant 0 : index
    %2 = vector.load %arg4[%c0_3, %c0_4] : memref<32x16xf32, #tpu.memory_space<vmem>>, vector<32x16xf32>
    %c0_5 = arith.constant 0 : index
    %c0_6 = arith.constant 0 : index
    %3 = vector.load %arg5[%c0_5, %c0_6] : memref<32x1xf32, #tpu.memory_space<vmem>>, vector<32x1xf32>
    %c0_7 = arith.constant 0 : index
    %c0_8 = arith.constant 0 : index
    %4 = vector.load %arg6[%c0_7, %c0_8] : memref<16x32xf32, #tpu.memory_space<vmem>>, vector<16x32xf32>
    %c0_9 = arith.constant 0 : index
    %c0_10 = arith.constant 0 : index
    %5 = vector.load %arg7[%c0_9, %c0_10] : memref<16x1xf32, #tpu.memory_space<vmem>>, vector<16x1xf32>
    %c0_11 = arith.constant 0 : index
    %c0_12 = arith.constant 0 : index
    %6 = vector.load %arg8[%c0_11, %c0_12] : memref<8x16xf32, #tpu.memory_space<vmem>>, vector<8x16xf32>
    %c0_13 = arith.constant 0 : index
    %c0_14 = arith.constant 0 : index
    %7 = vector.load %arg9[%c0_13, %c0_14] : memref<8x1xf32, #tpu.memory_space<vmem>>, vector<8x1xf32>
    %c0_15 = arith.constant 0 : index
    %c0_16 = arith.constant 0 : index
    %8 = vector.load %arg1[%c0_15, %c0_16] : memref<2x512xf32, #tpu.memory_space<vmem>>, vector<2x256xf32>
    %9 = vector.extract_strided_slice %0 {offsets = [0, 0], sizes = [16, 1], strides = [1, 1]} : vector<16x2xf32> to vector<16x1xf32>
    %10 = vector.extract_strided_slice %8 {offsets = [0, 0], sizes = [1, 256], strides = [1, 1]} : vector<2x256xf32> to vector<1x256xf32>
    %11 = vector.broadcast %9 : vector<16x1xf32> to vector<16x256xf32>
    %12 = vector.broadcast %10 : vector<1x256xf32> to vector<16x256xf32>
    %13 = arith.mulf %11, %12 : vector<16x256xf32>
    %14 = vector.extract_strided_slice %0 {offsets = [0, 1], sizes = [16, 1], strides = [1, 1]} : vector<16x2xf32> to vector<16x1xf32>
    %15 = vector.extract_strided_slice %8 {offsets = [1, 0], sizes = [1, 256], strides = [1, 1]} : vector<2x256xf32> to vector<1x256xf32>
    %16 = vector.broadcast %14 : vector<16x1xf32> to vector<16x256xf32>
    %17 = vector.broadcast %15 : vector<1x256xf32> to vector<16x256xf32>
    %18 = arith.mulf %16, %17 : vector<16x256xf32>
    %19 = arith.addf %13, %18 : vector<16x256xf32>
    %20 = vector.broadcast %1 : vector<16x1xf32> to vector<16x256xf32>
    %21 = arith.addf %19, %20 : vector<16x256xf32>
    %cst = arith.constant 0.000000e+00 : f32
    %22 = vector.broadcast %cst : f32 to vector<16x256xf32>
    %23 = arith.cmpf ogt, %21, %22 : vector<16x256xf32>
    %cst_17 = arith.constant 0.00999999977 : f32
    %24 = vector.broadcast %cst_17 : f32 to vector<16x256xf32>
    %25 = arith.mulf %24, %21 : vector<16x256xf32>
    %26 = arith.select %23, %21, %25 : vector<16x256xi1>, vector<16x256xf32>
    %cst_18 = arith.constant dense<0.000000e+00> : vector<32x256xf32>
    %27 = tpu.matmul %2, %26, %cst_18 {dimension_numbers = #tpu.dot_dimension_numbers<[1], [0], [0], [1], [0, 0, 1, 1], [], []>} : vector<32x16xf32>, vector<16x256xf32>, vector<32x256xf32> -> vector<32x256xf32>
    %28 = vector.broadcast %3 : vector<32x1xf32> to vector<32x256xf32>
    %29 = arith.addf %27, %28 : vector<32x256xf32>
    %cst_19 = arith.constant 0.000000e+00 : f32
    %30 = vector.broadcast %cst_19 : f32 to vector<32x256xf32>
    %31 = arith.cmpf ogt, %29, %30 : vector<32x256xf32>
    %cst_20 = arith.constant 0.00999999977 : f32
    %32 = vector.broadcast %cst_20 : f32 to vector<32x256xf32>
    %33 = arith.mulf %32, %29 : vector<32x256xf32>
    %34 = arith.select %31, %29, %33 : vector<32x256xi1>, vector<32x256xf32>
    %cst_21 = arith.constant dense<0.000000e+00> : vector<16x256xf32>
    %35 = tpu.matmul %4, %34, %cst_21 {dimension_numbers = #tpu.dot_dimension_numbers<[1], [0], [0], [1], [0, 0, 1, 1], [], []>} : vector<16x32xf32>, vector<32x256xf32>, vector<16x256xf32> -> vector<16x256xf32>
    %36 = vector.broadcast %5 : vector<16x1xf32> to vector<16x256xf32>
    %37 = arith.addf %35, %36 : vector<16x256xf32>
    %cst_22 = arith.constant 0.000000e+00 : f32
    %38 = vector.broadcast %cst_22 : f32 to vector<16x256xf32>
    %39 = arith.cmpf ogt, %37, %38 : vector<16x256xf32>
    %cst_23 = arith.constant 0.00999999977 : f32
    %40 = vector.broadcast %cst_23 : f32 to vector<16x256xf32>
    %41 = arith.mulf %40, %37 : vector<16x256xf32>
    %42 = arith.select %39, %37, %41 : vector<16x256xi1>, vector<16x256xf32>
    %cst_24 = arith.constant dense<0.000000e+00> : vector<8x256xf32>
    %43 = tpu.matmul %6, %42, %cst_24 {dimension_numbers = #tpu.dot_dimension_numbers<[1], [0], [0], [1], [0, 0, 1, 1], [], []>} : vector<8x16xf32>, vector<16x256xf32>, vector<8x256xf32> -> vector<8x256xf32>
    %44 = vector.broadcast %7 : vector<8x1xf32> to vector<8x256xf32>
    %45 = arith.addf %43, %44 : vector<8x256xf32>
    %c0_25 = arith.constant 0 : index
    %c0_26 = arith.constant 0 : index
    %46 = vector.load %arg10[%c0_25, %c0_26] : memref<8x512xf32, #tpu.memory_space<vmem>>, vector<8x256xf32>
    tpu.vector_store %arg10[%c0_25, %c0_26], %45 {strides = array<i32>} : memref<8x512xf32, #tpu.memory_space<vmem>>, vector<8x256xf32>,
    %c0_27 = arith.constant 0 : index
    %c256 = arith.constant 256 : index
    %47 = vector.load %arg1[%c0_27, %c256] : memref<2x512xf32, #tpu.memory_space<vmem>>, vector<2x256xf32>
    %48 = vector.extract_strided_slice %0 {offsets = [0, 0], sizes = [16, 1], strides = [1, 1]} : vector<16x2xf32> to vector<16x1xf32>
    %49 = vector.extract_strided_slice %47 {offsets = [0, 0], sizes = [1, 256], strides = [1, 1]} : vector<2x256xf32> to vector<1x256xf32>
    %50 = vector.broadcast %48 : vector<16x1xf32> to vector<16x256xf32>
    %51 = vector.broadcast %49 : vector<1x256xf32> to vector<16x256xf32>
    %52 = arith.mulf %50, %51 : vector<16x256xf32>
    %53 = vector.extract_strided_slice %0 {offsets = [0, 1], sizes = [16, 1], strides = [1, 1]} : vector<16x2xf32> to vector<16x1xf32>
    %54 = vector.extract_strided_slice %47 {offsets = [1, 0], sizes = [1, 256], strides = [1, 1]} : vector<2x256xf32> to vector<1x256xf32>
    %55 = vector.broadcast %53 : vector<16x1xf32> to vector<16x256xf32>
    %56 = vector.broadcast %54 : vector<1x256xf32> to vector<16x256xf32>
    %57 = arith.mulf %55, %56 : vector<16x256xf32>
    %58 = arith.addf %52, %57 : vector<16x256xf32>
    %59 = vector.broadcast %1 : vector<16x1xf32> to vector<16x256xf32>
    %60 = arith.addf %58, %59 : vector<16x256xf32>
    %cst_28 = arith.constant 0.000000e+00 : f32
    %61 = vector.broadcast %cst_28 : f32 to vector<16x256xf32>
    %62 = arith.cmpf ogt, %60, %61 : vector<16x256xf32>
    %cst_29 = arith.constant 0.00999999977 : f32
    %63 = vector.broadcast %cst_29 : f32 to vector<16x256xf32>
    %64 = arith.mulf %63, %60 : vector<16x256xf32>
    %65 = arith.select %62, %60, %64 : vector<16x256xi1>, vector<16x256xf32>
    %cst_30 = arith.constant dense<0.000000e+00> : vector<32x256xf32>
    %66 = tpu.matmul %2, %65, %cst_30 {dimension_numbers = #tpu.dot_dimension_numbers<[1], [0], [0], [1], [0, 0, 1, 1], [], []>} : vector<32x16xf32>, vector<16x256xf32>, vector<32x256xf32> -> vector<32x256xf32>
    %67 = vector.broadcast %3 : vector<32x1xf32> to vector<32x256xf32>
    %68 = arith.addf %66, %67 : vector<32x256xf32>
    %cst_31 = arith.constant 0.000000e+00 : f32
    %69 = vector.broadcast %cst_31 : f32 to vector<32x256xf32>
    %70 = arith.cmpf ogt, %68, %69 : vector<32x256xf32>
    %cst_32 = arith.constant 0.00999999977 : f32
    %71 = vector.broadcast %cst_32 : f32 to vector<32x256xf32>
    %72 = arith.mulf %71, %68 : vector<32x256xf32>
    %73 = arith.select %70, %68, %72 : vector<32x256xi1>, vector<32x256xf32>
    %cst_33 = arith.constant dense<0.000000e+00> : vector<16x256xf32>
    %74 = tpu.matmul %4, %73, %cst_33 {dimension_numbers = #tpu.dot_dimension_numbers<[1], [0], [0], [1], [0, 0, 1, 1], [], []>} : vector<16x32xf32>, vector<32x256xf32>, vector<16x256xf32> -> vector<16x256xf32>
    %75 = vector.broadcast %5 : vector<16x1xf32> to vector<16x256xf32>
    %76 = arith.addf %74, %75 : vector<16x256xf32>
    %cst_34 = arith.constant 0.000000e+00 : f32
    %77 = vector.broadcast %cst_34 : f32 to vector<16x256xf32>
    %78 = arith.cmpf ogt, %76, %77 : vector<16x256xf32>
    %cst_35 = arith.constant 0.00999999977 : f32
    %79 = vector.broadcast %cst_35 : f32 to vector<16x256xf32>
    %80 = arith.mulf %79, %76 : vector<16x256xf32>
    %81 = arith.select %78, %76, %80 : vector<16x256xi1>, vector<16x256xf32>
    %cst_36 = arith.constant dense<0.000000e+00> : vector<8x256xf32>
    %82 = tpu.matmul %6, %81, %cst_36 {dimension_numbers = #tpu.dot_dimension_numbers<[1], [0], [0], [1], [0, 0, 1, 1], [], []>} : vector<8x16xf32>, vector<16x256xf32>, vector<8x256xf32> -> vector<8x256xf32>
    %83 = vector.broadcast %7 : vector<8x1xf32> to vector<8x256xf32>
    %84 = arith.addf %82, %83 : vector<8x256xf32>
    %c0_37 = arith.constant 0 : index
    %c256_38 = arith.constant 256 : index
    %85 = vector.load %arg10[%c0_37, %c256_38] : memref<8x512xf32, #tpu.memory_space<vmem>>, vector<8x256xf32>
    tpu.vector_store %arg10[%c0_37, %c256_38], %84 {strides = array<i32>} : memref<8x512xf32, #tpu.memory_space<vmem>>, vector<8x256xf32>,
    return
  }
  func.func @transform_0(%arg0: i32) -> (i32, i32) {
    %c0_i32 = arith.constant 0 : i32
    %c0_i32_0 = arith.constant 0 : i32
    return %c0_i32, %arg0 : i32, i32
  }
  func.func @transform_1(%arg0: i32) -> (i32, i32) {
    %c0_i32 = arith.constant 0 : i32
    %c0_i32_0 = arith.constant 0 : i32
    %c0_i32_1 = arith.constant 0 : i32
    return %c0_i32, %c0_i32_0 : i32, i32
  }
  func.func @transform_2(%arg0: i32) -> (i32, i32) {
    %c0_i32 = arith.constant 0 : i32
    %c0_i32_0 = arith.constant 0 : i32
    %c0_i32_1 = arith.constant 0 : i32
    return %c0_i32, %c0_i32_0 : i32, i32
  }
  func.func @transform_3(%arg0: i32) -> (i32, i32) {
    %c0_i32 = arith.constant 0 : i32
    %c0_i32_0 = arith.constant 0 : i32
    %c0_i32_1 = arith.constant 0 : i32
    return %c0_i32, %c0_i32_0 : i32, i32
  }
  func.func @transform_4(%arg0: i32) -> (i32, i32) {
    %c0_i32 = arith.constant 0 : i32
    %c0_i32_0 = arith.constant 0 : i32
    %c0_i32_1 = arith.constant 0 : i32
    return %c0_i32, %c0_i32_0 : i32, i32
  }
  func.func @transform_5(%arg0: i32) -> (i32, i32) {
    %c0_i32 = arith.constant 0 : i32
    %c0_i32_0 = arith.constant 0 : i32
    %c0_i32_1 = arith.constant 0 : i32
    return %c0_i32, %c0_i32_0 : i32, i32
  }
  func.func @transform_6(%arg0: i32) -> (i32, i32) {
    %c0_i32 = arith.constant 0 : i32
    %c0_i32_0 = arith.constant 0 : i32
    %c0_i32_1 = arith.constant 0 : i32
    return %c0_i32, %c0_i32_0 : i32, i32
  }
  func.func @transform_7(%arg0: i32) -> (i32, i32) {
    %c0_i32 = arith.constant 0 : i32
    %c0_i32_0 = arith.constant 0 : i32
    %c0_i32_1 = arith.constant 0 : i32
    return %c0_i32, %c0_i32_0 : i32, i32
  }
  func.func @transform_8(%arg0: i32) -> (i32, i32) {
    %c0_i32 = arith.constant 0 : i32
    %c0_i32_0 = arith.constant 0 : i32
    %c0_i32_1 = arith.constant 0 : i32
    return %c0_i32, %c0_i32_0 : i32, i32
  }
  func.func @transform_9(%arg0: i32) -> (i32, i32) {
    %c0_i32 = arith.constant 0 : i32
    %c0_i32_0 = arith.constant 0 : i32
    return %c0_i32, %arg0 : i32, i32
  }
}

</mosaic_0001>

<llo_original>
// kernel: pca_to_latent_forward.1
$region0: #{pca_to_latent_forward.1}
  #allocation0 [shape = 'u32[]', space=smem, size = 0x4, offset = 0x4, fixed_abs, tag = 'smem constant byte address 0x4 - core index']
  #allocation1 [shape = 'u32[144,128]{1,0:T(1,128)}', space=vmem, size = 0x12000, scoped, tag = 'internal scratch']
  %s0 = inlined_call_operand.vmem [shape: f32[2,1024], index: 0, kind: input, shape index: {}]
  %s1 = inlined_call_operand.vmem [shape: f32[16,2], index: 1, kind: input, shape index: {}]
  %s2 = inlined_call_operand.vmem [shape: f32[16,1], index: 2, kind: input, shape index: {}]
  %s3 = inlined_call_operand.vmem [shape: f32[32,16], index: 3, kind: input, shape index: {}]
  %s4 = inlined_call_operand.vmem [shape: f32[32,1], index: 4, kind: input, shape index: {}]
  %s5 = inlined_call_operand.vmem [shape: f32[16,32], index: 5, kind: input, shape index: {}]
  %s6 = inlined_call_operand.vmem [shape: f32[16,1], index: 6, kind: input, shape index: {}]
  %s7 = inlined_call_operand.vmem [shape: f32[8,16], index: 7, kind: input, shape index: {}]
  %s8 = inlined_call_operand.vmem [shape: f32[8,1], index: 8, kind: input, shape index: {}]
  %s9 = inlined_call_operand.vmem [shape: f32[8,1024], index: 9, kind: output, shape index: {}]
  %s10 = sld [smem:[#allocation0]]
  $region69: #{pca_to_latent_forward.1} parent=0
    _
  %s12 = ssub.s32 1, %s10
  %s13 = scalar_select 0, %s12, %s10
  loop: start=0, step=1, limit=4
  $region2: #{pca_to_latent_forward.1} parent=0 // loop_pre_header
    _
  $region3: #{pca_to_latent_forward.1} parent=0 // loop_header
    %s15 = sphi 0, %s19
    %p16 = scmp.ge.s32.totalorder %s15, 4
    %s25 = sphi 0, %s27
    %s28 = sphi 0, %s25
    %s29 = sphi 0, %s28
    %s45 = sphi 0, %s29
    %s49 = sphi 0, %s49
    %s51 = sphi 0, %s49
    %s52 = sphi 0, %s51
    %s66 = sphi 0, %s52
    %s70 = sphi 0, %s70
    %s72 = sphi 0, %s70
    %s73 = sphi 0, %s72
    %s87 = sphi 0, %s73
    %s91 = sphi 0, %s91
    %s93 = sphi 0, %s91
    %s94 = sphi 0, %s93
    %s108 = sphi 0, %s94
    %s112 = sphi 0, %s112
    %s114 = sphi 0, %s112
    %s115 = sphi 0, %s114
    %s129 = sphi 0, %s115
    %s133 = sphi 0, %s133
    %s135 = sphi 0, %s133
    %s136 = sphi 0, %s135
    %s150 = sphi 0, %s136
    %s154 = sphi 0, %s154
    %s156 = sphi 0, %s154
    %s157 = sphi 0, %s156
    %s171 = sphi 0, %s157
    %s175 = sphi 0, %s175
    %s177 = sphi 0, %s175
    %s178 = sphi 0, %s177
    %s192 = sphi 0, %s178
    %s196 = sphi 0, %s196
    %s198 = sphi 0, %s196
    %s199 = sphi 0, %s198
    %s213 = sphi 0, %s199
    %s219 = sphi 0, %s221
    %s222 = sphi 0, %s219
    %s223 = sphi 0, %s222
    %s239 = sphi 0, %s223
  $region4: #{pca_to_latent_forward.1} parent=0 // loop_header_branch
    %18 = sbr.rel (%p16) target = $region8
  $region5: #{pca_to_latent_forward.1} parent=0 // loop_body
    %s20 = ssub.s32 %s15, 1
    %s21 = ssub.s32 %s15, 2
    %s22 = sadd.s32 %s15, 1
    %s23 = ssub.s32 %s15, %s22
    %p24 = scmp.eq.s32.totalorder %s23, 0
    %s26 = sadd.s32 %s25, 1
    %s27 = scalar_select %p24, %s25, %s26
    %p30 = pneg %p24
    %p31 = scmp.eq.s32.totalorder %s15, 1
    %p32 = por %p30, %p31
    %p33 = scmp.ne.s32.totalorder %s25, %s28
    %p34 = scmp.eq.s32.totalorder %s15, 0
    %p35 = por %p33, %p34
    %p36 = scmp.ne.s32.totalorder %s25, %s28
    %p37 = scmp.eq.s32.totalorder %s20, 1
    %p38 = por %p36, %p37
    %p39 = scmp.ne.s32.totalorder %s28, %s29
    %p40 = scmp.eq.s32.totalorder %s20, 0
    %p41 = por %p39, %p40
    %p42 = scmp.ne.s32.totalorder %s28, %s29
    %p43 = scmp.eq.s32.totalorder %s21, 1
    %p44 = por %p42, %p43
    %p46 = scmp.ne.s32.totalorder %s29, %s45
    %p47 = scmp.eq.s32.totalorder %s21, 0
    %p48 = por %p46, %p47
    %s50 = sadd.s32 %s49, 1
    %p53 = scmp.eq.s32.totalorder %s15, 1
    %p54 = scmp.ne.s32.totalorder %s49, %s51
    %p55 = scmp.eq.s32.totalorder %s15, 0
    %p56 = por %p54, %p55
    %p57 = scmp.ne.s32.totalorder %s49, %s51
    %p58 = scmp.eq.s32.totalorder %s20, 1
    %p59 = por %p57, %p58
    %p60 = scmp.ne.s32.totalorder %s51, %s52
    %p61 = scmp.eq.s32.totalorder %s20, 0
    %p62 = por %p60, %p61
    %p63 = scmp.ne.s32.totalorder %s51, %s52
    %p64 = scmp.eq.s32.totalorder %s21, 1
    %p65 = por %p63, %p64
    %p67 = scmp.ne.s32.totalorder %s52, %s66
    %p68 = scmp.eq.s32.totalorder %s21, 0
    %p69 = por %p67, %p68
    %s71 = sadd.s32 %s70, 1
    %p74 = scmp.eq.s32.totalorder %s15, 1
    %p75 = scmp.ne.s32.totalorder %s70, %s72
    %p76 = scmp.eq.s32.totalorder %s15, 0
    %p77 = por %p75, %p76
    %p78 = scmp.ne.s32.totalorder %s70, %s72
    %p79 = scmp.eq.s32.totalorder %s20, 1
    %p80 = por %p78, %p79
    %p81 = scmp.ne.s32.totalorder %s72, %s73
    %p82 = scmp.eq.s32.totalorder %s20, 0
    %p83 = por %p81, %p82
    %p84 = scmp.ne.s32.totalorder %s72, %s73
    %p85 = scmp.eq.s32.totalorder %s21, 1
    %p86 = por %p84, %p85
    %p88 = scmp.ne.s32.totalorder %s73, %s87
    %p89 = scmp.eq.s32.totalorder %s21, 0
    %p90 = por %p88, %p89
    %s92 = sadd.s32 %s91, 1
    %p95 = scmp.eq.s32.totalorder %s15, 1
    %p96 = scmp.ne.s32.totalorder %s91, %s93
    %p97 = scmp.eq.s32.totalorder %s15, 0
    %p98 = por %p96, %p97
    %p99 = scmp.ne.s32.totalorder %s91, %s93
    %p100 = scmp.eq.s32.totalorder %s20, 1
    %p101 = por %p99, %p100
    %p102 = scmp.ne.s32.totalorder %s93, %s94
    %p103 = scmp.eq.s32.totalorder %s20, 0
    %p104 = por %p102, %p103
    %p105 = scmp.ne.s32.totalorder %s93, %s94
    %p106 = scmp.eq.s32.totalorder %s21, 1
    %p107 = por %p105, %p106
    %p109 = scmp.ne.s32.totalorder %s94, %s108
    %p110 = scmp.eq.s32.totalorder %s21, 0
    %p111 = por %p109, %p110
    %s113 = sadd.s32 %s112, 1
    %p116 = scmp.eq.s32.totalorder %s15, 1
    %p117 = scmp.ne.s32.totalorder %s112, %s114
    %p118 = scmp.eq.s32.totalorder %s15, 0
    %p119 = por %p117, %p118
    %p120 = scmp.ne.s32.totalorder %s112, %s114
    %p121 = scmp.eq.s32.totalorder %s20, 1
    %p122 = por %p120, %p121
    %p123 = scmp.ne.s32.totalorder %s114, %s115
    %p124 = scmp.eq.s32.totalorder %s20, 0
    %p125 = por %p123, %p124
    %p126 = scmp.ne.s32.totalorder %s114, %s115
    %p127 = scmp.eq.s32.totalorder %s21, 1
    %p128 = por %p126, %p127
    %p130 = scmp.ne.s32.totalorder %s115, %s129
    %p131 = scmp.eq.s32.totalorder %s21, 0
    %p132 = por %p130, %p131
    %s134 = sadd.s32 %s133, 1
    %p137 = scmp.eq.s32.totalorder %s15, 1
    %p138 = scmp.ne.s32.totalorder %s133, %s135
    %p139 = scmp.eq.s32.totalorder %s15, 0
    %p140 = por %p138, %p139
    %p141 = scmp.ne.s32.totalorder %s133, %s135
    %p142 = scmp.eq.s32.totalorder %s20, 1
    %p143 = por %p141, %p142
    %p144 = scmp.ne.s32.totalorder %s135, %s136
    %p145 = scmp.eq.s32.totalorder %s20, 0
    %p146 = por %p144, %p145
    %p147 = scmp.ne.s32.totalorder %s135, %s136
    %p148 = scmp.eq.s32.totalorder %s21, 1
    %p149 = por %p147, %p148
    %p151 = scmp.ne.s32.totalorder %s136, %s150
    %p152 = scmp.eq.s32.totalorder %s21, 0
    %p153 = por %p151, %p152
    %s155 = sadd.s32 %s154, 1
    %p158 = scmp.eq.s32.totalorder %s15, 1
    %p159 = scmp.ne.s32.totalorder %s154, %s156
    %p160 = scmp.eq.s32.totalorder %s15, 0
    %p161 = por %p159, %p160
    %p162 = scmp.ne.s32.totalorder %s154, %s156
    %p163 = scmp.eq.s32.totalorder %s20, 1
    %p164 = por %p162, %p163
    %p165 = scmp.ne.s32.totalorder %s156, %s157
    %p166 = scmp.eq.s32.totalorder %s20, 0
    %p167 = por %p165, %p166
    %p168 = scmp.ne.s32.totalorder %s156, %s157
    %p169 = scmp.eq.s32.totalorder %s21, 1
    %p170 = por %p168, %p169
    %p172 = scmp.ne.s32.totalorder %s157, %s171
    %p173 = scmp.eq.s32.totalorder %s21, 0
    %p174 = por %p172, %p173
    %s176 = sadd.s32 %s175, 1
    %p179 = scmp.eq.s32.totalorder %s15, 1
    %p180 = scmp.ne.s32.totalorder %s175, %s177
    %p181 = scmp.eq.s32.totalorder %s15, 0
    %p182 = por %p180, %p181
    %p183 = scmp.ne.s32.totalorder %s175, %s177
    %p184 = scmp.eq.s32.totalorder %s20, 1
    %p185 = por %p183, %p184
    %p186 = scmp.ne.s32.totalorder %s177, %s178
    %p187 = scmp.eq.s32.totalorder %s20, 0
    %p188 = por %p186, %p187
    %p189 = scmp.ne.s32.totalorder %s177, %s178
    %p190 = scmp.eq.s32.totalorder %s21, 1
    %p191 = por %p189, %p190
    %p193 = scmp.ne.s32.totalorder %s178, %s192
    %p194 = scmp.eq.s32.totalorder %s21, 0
    %p195 = por %p193, %p194
    %s197 = sadd.s32 %s196, 1
    %p200 = scmp.eq.s32.totalorder %s15, 1
    %p201 = scmp.ne.s32.totalorder %s196, %s198
    %p202 = scmp.eq.s32.totalorder %s15, 0
    %p203 = por %p201, %p202
    %p204 = scmp.ne.s32.totalorder %s196, %s198
    %p205 = scmp.eq.s32.totalorder %s20, 1
    %p206 = por %p204, %p205
    %p207 = scmp.ne.s32.totalorder %s198, %s199
    %p208 = scmp.eq.s32.totalorder %s20, 0
    %p209 = por %p207, %p208
    %p210 = scmp.ne.s32.totalorder %s198, %s199
    %p211 = scmp.eq.s32.totalorder %s21, 1
    %p212 = por %p210, %p211
    %p214 = scmp.ne.s32.totalorder %s199, %s213
    %p215 = scmp.eq.s32.totalorder %s21, 0
    %p216 = por %p214, %p215
    %s217 = ssub.s32 %s15, %s22
    %p218 = scmp.eq.s32.totalorder %s217, 0
    %s220 = sadd.s32 %s219, 1
    %s221 = scalar_select %p218, %s219, %s220
    %p224 = pneg %p218
    %p225 = scmp.eq.s32.totalorder %s15, 1
    %p226 = por %p224, %p225
    %p227 = scmp.ne.s32.totalorder %s219, %s222
    %p228 = scmp.eq.s32.totalorder %s15, 0
    %p229 = por %p227, %p228
    %p230 = scmp.ne.s32.totalorder %s219, %s222
    %p231 = scmp.eq.s32.totalorder %s20, 1
    %p232 = por %p230, %p231
    %p233 = scmp.ne.s32.totalorder %s222, %s223
    %p234 = scmp.eq.s32.totalorder %s20, 0
    %p235 = por %p233, %p234
    %p236 = scmp.ne.s32.totalorder %s222, %s223
    %p237 = scmp.eq.s32.totalorder %s21, 1
    %p238 = por %p236, %p237
    %p240 = scmp.ne.s32.totalorder %s223, %s239
    %p241 = scmp.eq.s32.totalorder %s21, 0
    %p242 = por %p240, %p241
    %p243 = scmp.le.s32.totalorder 1, %s15
    %p244 = scmp.lt.s32.totalorder %s15, 3
    %p245 = pnand %p243, %p244
    %p246 = pneg %p245
    // Predicated region
    $region9: #{pca_to_latent_forward.1} parent=5 // pred_check
      _
    $region10: #{pca_to_latent_forward.1} parent=5 // pred_check_branch
      %248 = sbr.rel (%p245) target = $region12
    $region11: #{pca_to_latent_forward.1} parent=5 // pred_region
      %s249 = ssub.s32 %s15, 1
      // Predicated region
      $region13: #{pca_to_latent_forward.1} parent=11 // pred_check
        %p250 = pneg %p62
      $region14: #{pca_to_latent_forward.1} parent=11 // pred_check_branch
        %252 = sbr.rel (%p250) target = $region16
      $region15: #{pca_to_latent_forward.1} parent=11 // pred_region
        _
      $region16: #{pca_to_latent_forward.1} parent=11 // pred_fallthru
        _
      // Predicated region
      $region17: #{pca_to_latent_forward.1} parent=11 // pred_check
        %p253 = pneg %p83
      $region18: #{pca_to_latent_forward.1} parent=11 // pred_check_branch
        %255 = sbr.rel (%p253) target = $region20
      $region19: #{pca_to_latent_forward.1} parent=11 // pred_region
        _
      $region20: #{pca_to_latent_forward.1} parent=11 // pred_fallthru
        _
      // Predicated region
      $region21: #{pca_to_latent_forward.1} parent=11 // pred_check
        %p256 = pneg %p104
      $region22: #{pca_to_latent_forward.1} parent=11 // pred_check_branch
        %258 = sbr.rel (%p256) target = $region24
      $region23: #{pca_to_latent_forward.1} parent=11 // pred_region
        _
      $region24: #{pca_to_latent_forward.1} parent=11 // pred_fallthru
        _
      // Predicated region
      $region25: #{pca_to_latent_forward.1} parent=11 // pred_check
        %p259 = pneg %p125
      $region26: #{pca_to_latent_forward.1} parent=11 // pred_check_branch
        %261 = sbr.rel (%p259) target = $region28
      $region27: #{pca_to_latent_forward.1} parent=11 // pred_region
        _
      $region28: #{pca_to_latent_forward.1} parent=11 // pred_fallthru
        _
      // Predicated region
      $region29: #{pca_to_latent_forward.1} parent=11 // pred_check
        %p262 = pneg %p146
      $region30: #{pca_to_latent_forward.1} parent=11 // pred_check_branch
        %264 = sbr.rel (%p262) target = $region32
      $region31: #{pca_to_latent_forward.1} parent=11 // pred_region
        _
      $region32: #{pca_to_latent_forward.1} parent=11 // pred_fallthru
        _
      // Predicated region
      $region33: #{pca_to_latent_forward.1} parent=11 // pred_check
        %p265 = pneg %p167
      $region34: #{pca_to_latent_forward.1} parent=11 // pred_check_branch
        %267 = sbr.rel (%p265) target = $region36
      $region35: #{pca_to_latent_forward.1} parent=11 // pred_region
        _
      $region36: #{pca_to_latent_forward.1} parent=11 // pred_fallthru
        _
      // Predicated region
      $region37: #{pca_to_latent_forward.1} parent=11 // pred_check
        %p268 = pneg %p188
      $region38: #{pca_to_latent_forward.1} parent=11 // pred_check_branch
        %270 = sbr.rel (%p268) target = $region40
      $region39: #{pca_to_latent_forward.1} parent=11 // pred_region
        _
      $region40: #{pca_to_latent_forward.1} parent=11 // pred_fallthru
        _
      // Predicated region
      $region41: #{pca_to_latent_forward.1} parent=11 // pred_check
        %p271 = pneg %p209
      $region42: #{pca_to_latent_forward.1} parent=11 // pred_check_branch
        %273 = sbr.rel (%p271) target = $region44
      $region43: #{pca_to_latent_forward.1} parent=11 // pred_region
        _
      $region44: #{pca_to_latent_forward.1} parent=11 // pred_fallthru
        _
    $region12: #{pca_to_latent_forward.1} parent=5 // pred_fallthru
      _
    %p274 = scmp.lt.s32.totalorder %s15, 2
    // Predicated region
    $region45: #{pca_to_latent_forward.1} parent=5 // pred_check
      %p275 = pneg %p274
    $region46: #{pca_to_latent_forward.1} parent=5 // pred_check_branch
      %277 = sbr.rel (%p275) target = $region48
    $region47: #{pca_to_latent_forward.1} parent=5 // pred_region
      // Predicated region
      $region49: #{pca_to_latent_forward.1} parent=47 // pred_check
        %p278 = pneg %p35
      $region50: #{pca_to_latent_forward.1} parent=47 // pred_check_branch
        %280 = sbr.rel (%p278) target = $region52
      $region51: #{pca_to_latent_forward.1} parent=47 // pred_region
        %s281 = smul.u32 4, %s15
        %p282 = scmp.lt.s32.totalorder %s281, 7
        %s283 = scalar_select %p282, %s281, 7
        %s284 = smul.addr %s283, 2
        %s285 = scalar_lea.vmem %s0, %s284
        %s286 = smul.u32 4, %s15
      $region52: #{pca_to_latent_forward.1} parent=47 // pred_fallthru
        _
    $region48: #{pca_to_latent_forward.1} parent=5 // pred_fallthru
      _
    %p287 = scmp.le.s32.totalorder 1, %s15
    %p288 = scmp.lt.s32.totalorder %s15, 3
    %p289 = pnand %p287, %p288
    %p290 = pneg %p289
    // Predicated region
    $region53: #{pca_to_latent_forward.1} parent=5 // pred_check
      _
    $region54: #{pca_to_latent_forward.1} parent=5 // pred_check_branch
      %292 = sbr.rel (%p289) target = $region56
    $region55: #{pca_to_latent_forward.1} parent=5 // pred_region
      %s293 = ssub.s32 %s15, 1
      %s294 = smul.u32 4, %s20
      %p295 = scmp.lt.s32.totalorder %s294, 7
      %s296 = scalar_select %p295, %s294, 7
      %s297 = smul.addr %s296, 2
      %s298 = scalar_lea.vmem %s0, %s297
      %p299 = pneg %p41
      %p300 = pneg %p38
      %p301 = pneg %p62
      %p302 = pneg %p59
      %p303 = pneg %p83
      %p304 = pneg %p80
      %p305 = pneg %p104
      %p306 = pneg %p101
      %p307 = pneg %p125
      %p308 = pneg %p122
      %p309 = pneg %p146
      %p310 = pneg %p143
      %p311 = pneg %p167
      %p312 = pneg %p164
      %p313 = pneg %p188
      %p314 = pneg %p185
      %p315 = pneg %p209
      %p316 = pneg %p206
      %p317 = pneg %p235
      %p318 = pneg %p232
      %s319 = smul.u32 4, %s20
      %p320 = scmp.lt.s32.totalorder %s319, 7
      %s321 = scalar_select %p320, %s319, 7
      %s322 = smul.addr %s321, 8
      %s323 = scalar_lea.vmem %s9, %s322
      %s324 = smul.u32 4, %s20
      %p325 = scmp.lt.s32.totalorder %s324, 7
      %s326 = scalar_select %p325, %s324, 7
      %s327 = smul.addr %s326, 2
      %s328 = scalar_lea.vmem %s0, %s327
      %s329 = smul.u32 4, %s20
      %s330 = smul.u32 4, %s20
      %p331 = scmp.lt.s32.totalorder %s330, 7
      %s332 = scalar_select %p331, %s330, 7
      %s333 = smul.addr %s332, 8
      %s334 = scalar_lea.vmem %s9, %s333
      %s335 = smul.u32 4, %s20
      %v336 = vld [vmem:[%s1] sm:$0xff]
      %v337 = vld [vmem:[%s1 + $0x8] sm:$0xff]
      %v338 = vld [vmem:[%s2] sm:$0xff]
      %v339 = vld [vmem:[%s2 + $0x8] sm:$0xff]
      %v340 = vld [vmem:[%s3] sm:$0xff]
      %v341 = vld [vmem:[%s3 + $0x8] sm:$0xff]
      %v342 = vld [vmem:[%s3 + $0x10] sm:$0xff]
      %v343 = vld [vmem:[%s3 + $0x18] sm:$0xff]
      %v344 = vld [vmem:[%s4] sm:$0xff]
      %v345 = vld [vmem:[%s4 + $0x8] sm:$0xff]
      %v346 = vld [vmem:[%s4 + $0x10] sm:$0xff]
      %v347 = vld [vmem:[%s4 + $0x18] sm:$0xff]
      %v348 = vld [vmem:[%s5] sm:$0xff]
      %v349 = vld [vmem:[%s5 + $0x8] sm:$0xff]
      %v350 = vld [vmem:[%s6] sm:$0xff]
      %v351 = vld [vmem:[%s6 + $0x8] sm:$0xff]
      %v352 = vld [vmem:[%s7] sm:$0xff]
      %v353 = vld [vmem:[%s8] sm:$0xff]
      %v354 = vld [vmem:[%s328] sm:$0xf]
      %356 = vset.pattern.permute.xlu0 0
      %357 = vperm.xlu0 %356, %v336
      %v358 = vpop.permute.xlu0 %357
      %361 = vset.pattern.permute.xlu0 0
      %362 = vperm.xlu0 %361, %v337
      %v363 = vpop.permute.xlu0 %362
      %v366 = vlaneseq
      %v367 = vshrl.u32 %v366, 7
      %v368 = vsub.s32 0, %v367
      %v369 = vrot.slane %v354, %v368
      %v370 = vlaneseq
      %v371 = vshrl.u32 %v370, 7
      %v372 = vsub.s32 2, %v371
      %v373 = vrot.slane %v354, %v372
      %v376 = vlaneseq
      %v377 = vshrl.u32 %v376, 7
      %v378 = vsub.s32 0, %v377
      %v379 = vrot.slane %v369, %v378
      %v380 = vlaneseq
      %v381 = vshrl.u32 %v380, 7
      %v382 = vsub.s32 0, %v381
      %v383 = vrot.slane %v373, %v382
      %v384 = vmul.f32 %v358, %v379
      %v385 = vmul.f32 %v358, %v383
      %v386 = vmul.f32 %v363, %v379
      %v387 = vmul.f32 %v363, %v383
      %388 = vset.pattern.permute.xlu0 1
      %389 = vperm.xlu0 %388, %v336
      %v390 = vpop.permute.xlu0 %389
      %392 = vset.pattern.permute.xlu0 1
      %393 = vperm.xlu0 %392, %v337
      %v394 = vpop.permute.xlu0 %393
      %v396 = vlaneseq
      %v397 = vshrl.u32 %v396, 7
      %v398 = vsub.s32 1, %v397
      %v399 = vrot.slane %v354, %v398
      %v400 = vlaneseq
      %v401 = vshrl.u32 %v400, 7
      %v402 = vsub.s32 3, %v401
      %v403 = vrot.slane %v354, %v402
      %v406 = vlaneseq
      %v407 = vshrl.u32 %v406, 7
      %v408 = vsub.s32 1, %v407
      %v409 = vrot.slane %v399, %v408
      %v410 = vlaneseq
      %v411 = vshrl.u32 %v410, 7
      %v412 = vsub.s32 1, %v411
      %v413 = vrot.slane %v403, %v412
      %v414 = vmul.f32 %v390, %v409
      %v415 = vmul.f32 %v390, %v413
      %v416 = vmul.f32 %v394, %v409
      %v417 = vmul.f32 %v394, %v413
      %v418 = vadd.f32 %v384, %v414
      %v419 = vadd.f32 %v385, %v415
      %v420 = vadd.f32 %v386, %v416
      %v421 = vadd.f32 %v387, %v417
      %423 = vset.pattern.permute.xlu0 0
      %424 = vperm.xlu0 %423, %v338
      %v425 = vpop.permute.xlu0 %424
      %428 = vset.pattern.permute.xlu0 0
      %429 = vperm.xlu0 %428, %v339
      %v430 = vpop.permute.xlu0 %429
      %v432 = vadd.f32 %v418, %v425
      %v433 = vadd.f32 %v419, %v425
      %v434 = vadd.f32 %v420, %v430
      %v435 = vadd.f32 %v421, %v430
      %vm436 = vcmp.gt.f32.partialorder %v432, 0.0
      %vm437 = vcmp.gt.f32.partialorder %v433, 0.0
      %vm438 = vcmp.gt.f32.partialorder %v434, 0.0
      %vm439 = vcmp.gt.f32.partialorder %v435, 0.0
      %v440 = vmul.f32 %v432, 0.01
      %v441 = vmul.f32 %v433, 0.01
      %v442 = vmul.f32 %v434, 0.01
      %v443 = vmul.f32 %v435, 0.01
      %v444 = vsel %vm436, %v432, %v440
      %v445 = vsel %vm437, %v433, %v441
      %v446 = vsel %vm438, %v434, %v442
      %v447 = vsel %vm439, %v435, %v443
      %449 = vset.pattern.permute.xlu0 0
      %450 = vperm.xlu0 %449, %v344
      %v451 = vpop.permute.xlu0 %450
      %454 = vset.pattern.permute.xlu0 0
      %455 = vperm.xlu0 %454, %v345
      %v456 = vpop.permute.xlu0 %455
      %459 = vset.pattern.permute.xlu0 0
      %460 = vperm.xlu0 %459, %v346
      %v461 = vpop.permute.xlu0 %460
      %464 = vset.pattern.permute.xlu0 0
      %465 = vperm.xlu0 %464, %v347
      %v466 = vpop.permute.xlu0 %465
      %vm468 = vcmask 130048
      %v470 = vsel %vm468, %v340, 0
      %v473 = vsel %vm468, %v341, 0
      %v476 = vsel %vm468, %v342, 0
      %v479 = vsel %vm468, %v343, 0
      %481 = vmatprep.subr.mxu0 0.0
      %482 = vmatpush1.msra.mxu0 0.0
      %483 = vmatprep.subr.mxu0 0.0
      %484 = vmatpush1.msra.mxu0 0.0
      %485 = vmatprep.subr.mxu0 0.0
      %486 = vmatpush1.msra.mxu0 0.0
      %487 = vmatprep.subr.mxu0 0.0
      %488 = vmatpush1.msra.mxu0 0.0
      %489 = vmatprep.subr.mxu0 0.0
      %490 = vmatpush1.msra.mxu0 0.0
      %491 = vmatprep.subr.mxu0 0.0
      %492 = vmatpush1.msra.mxu0 0.0
      %493 = vmatprep.subr.mxu0 0.0
      %494 = vmatpush1.msra.mxu0 0.0
      %495 = vmatprep.subr.mxu0 0.0
      %496 = vmatpush1.msra.mxu0 0.0
      %497 = vmatprep.subr.mxu0 0.0
      %498 = vmatpush1.msra.mxu0 0.0
      %499 = vmatprep.subr.mxu0 0.0
      %500 = vmatpush1.msra.mxu0 0.0
      %501 = vmatprep.subr.mxu0 0.0
      %502 = vmatpush1.msra.mxu0 0.0
      %503 = vmatprep.subr.mxu0 0.0
      %504 = vmatpush1.msra.mxu0 0.0
      %505 = vmatprep.subr.mxu0 0.0
      %506 = vmatpush1.msra.mxu0 0.0
      %507 = vmatprep.subr.mxu0 0.0
      %508 = vmatpush1.msra.mxu0 0.0
      %509 = vmatprep.subr.mxu0 %v447
      %510 = vmatpush1.msra.mxu0 %v446
      %511 = vmatprep.subr.mxu0 %v445
      %512 = vmatpush1.msra.mxu0 %v444
      %513 = vmatprep.subr.mxu0 0.0
      %514 = vmatpush2.msra.mxu0 0.0
      %515 = vmatprep.subr.mxu0 0.0
      %516 = vmatpush2.msra.mxu0 0.0
      %517 = vmatprep.subr.mxu0 0.0
      %518 = vmatpush2.msra.mxu0 0.0
      %519 = vmatprep.subr.mxu0 0.0
      %520 = vmatpush2.msra.mxu0 0.0
      %521 = vmatprep.subr.mxu0 0.0
      %522 = vmatpush2.msra.mxu0 0.0
      %523 = vmatprep.subr.mxu0 0.0
      %524 = vmatpush2.msra.mxu0 0.0
      %525 = vmatprep.subr.mxu0 0.0
      %526 = vmatpush2.msra.mxu0 0.0
      %527 = vmatprep.subr.mxu0 0.0
      %528 = vmatpush2.msra.mxu0 0.0
      %529 = vmatprep.subr.mxu0 0.0
      %530 = vmatpush2.msra.mxu0 0.0
      %531 = vmatprep.subr.mxu0 0.0
      %532 = vmatpush2.msra.mxu0 0.0
      %533 = vmatprep.subr.mxu0 0.0
      %534 = vmatpush2.msra.mxu0 0.0
      %535 = vmatprep.subr.mxu0 0.0
      %536 = vmatpush2.msra.mxu0 0.0
      %537 = vmatprep.subr.mxu0 0.0
      %538 = vmatpush2.msra.mxu0 0.0
      %539 = vmatprep.subr.mxu0 0.0
      %540 = vmatpush2.msra.mxu0 0.0
      %541 = vmatprep.subr.mxu0 0.0
      %542 = vmatpush2.msra.mxu0 0.0
      %543 = vmatprep.subr.mxu0 0.0
      %544 = vmatpush2.msra.mxu0 0.0
      %545 = vmatprep.mubr.f32.mxu0 0.0
      %546 = vmatmul.mubr.f32.gmra.mxu0 %v470
      %v547 = vpop.f32.mrf.mxu0
      %v548 = vadd.f32 %v451, %v547
      %v549 = vpop.f32.mrf.mxu0
      %v550 = vadd.f32 %v451, %v549
      %551 = vmatprep.mubr.f32.mxu0 0.0
      %552 = vmatmul.mubr.f32.gmra.mxu0 %v473
      %v553 = vpop.f32.mrf.mxu0
      %v554 = vadd.f32 %v456, %v553
      %v555 = vpop.f32.mrf.mxu0
      %v556 = vadd.f32 %v456, %v555
      %557 = vmatprep.mubr.f32.mxu0 0.0
      %558 = vmatmul.mubr.f32.gmra.mxu0 %v476
      %v559 = vpop.f32.mrf.mxu0
      %v560 = vadd.f32 %v461, %v559
      %v561 = vpop.f32.mrf.mxu0
      %v562 = vadd.f32 %v461, %v561
      %563 = vmatprep.mubr.f32.mxu0 0.0
      %564 = vmatmul.mubr.f32.gmra.mxu0 %v479
      %v565 = vpop.f32.mrf.mxu0
      %v566 = vadd.f32 %v466, %v565
      %v567 = vpop.f32.mrf.mxu0
      %v568 = vadd.f32 %v466, %v567
      %569 = vdwg.mxu0
      %vm570 = vcmp.gt.f32.partialorder %v548, 0.0
      %vm571 = vcmp.gt.f32.partialorder %v550, 0.0
      %vm572 = vcmp.gt.f32.partialorder %v554, 0.0
      %vm573 = vcmp.gt.f32.partialorder %v556, 0.0
      %vm574 = vcmp.gt.f32.partialorder %v560, 0.0
      %vm575 = vcmp.gt.f32.partialorder %v562, 0.0
      %vm576 = vcmp.gt.f32.partialorder %v566, 0.0
      %vm577 = vcmp.gt.f32.partialorder %v568, 0.0
      %v578 = vmul.f32 %v548, 0.01
      %v579 = vmul.f32 %v550, 0.01
      %v580 = vmul.f32 %v554, 0.01
      %v581 = vmul.f32 %v556, 0.01
      %v582 = vmul.f32 %v560, 0.01
      %v583 = vmul.f32 %v562, 0.01
      %v584 = vmul.f32 %v566, 0.01
      %v585 = vmul.f32 %v568, 0.01
      %v586 = vsel %vm570, %v548, %v578
      %v587 = vsel %vm571, %v550, %v579
      %v588 = vsel %vm572, %v554, %v580
      %v589 = vsel %vm573, %v556, %v581
      %v590 = vsel %vm574, %v560, %v582
      %v591 = vsel %vm575, %v562, %v583
      %v592 = vsel %vm576, %v566, %v584
      %v593 = vsel %vm577, %v568, %v585
      %595 = vset.pattern.permute.xlu0 0
      %596 = vperm.xlu0 %595, %v350
      %v597 = vpop.permute.xlu0 %596
      %600 = vset.pattern.permute.xlu0 0
      %601 = vperm.xlu0 %600, %v351
      %v602 = vpop.permute.xlu0 %601
      %vm604 = vcmask 261120
      %v606 = vsel %vm604, %v348, 0
      %v609 = vsel %vm604, %v349, 0
      %611 = vmatprep.subr.mxu0 0.0
      %612 = vmatpush1.msra.mxu0 0.0
      %613 = vmatprep.subr.mxu0 0.0
      %614 = vmatpush1.msra.mxu0 0.0
      %615 = vmatprep.subr.mxu0 0.0
      %616 = vmatpush1.msra.mxu0 0.0
      %617 = vmatprep.subr.mxu0 0.0
      %618 = vmatpush1.msra.mxu0 0.0
      %619 = vmatprep.subr.mxu0 0.0
      %620 = vmatpush1.msra.mxu0 0.0
      %621 = vmatprep.subr.mxu0 0.0
      %622 = vmatpush1.msra.mxu0 0.0
      %623 = vmatprep.subr.mxu0 0.0
      %624 = vmatpush1.msra.mxu0 0.0
      %625 = vmatprep.subr.mxu0 0.0
      %626 = vmatpush1.msra.mxu0 0.0
      %627 = vmatprep.subr.mxu0 0.0
      %628 = vmatpush1.msra.mxu0 0.0
      %629 = vmatprep.subr.mxu0 0.0
      %630 = vmatpush1.msra.mxu0 0.0
      %631 = vmatprep.subr.mxu0 0.0
      %632 = vmatpush1.msra.mxu0 0.0
      %633 = vmatprep.subr.mxu0 0.0
      %634 = vmatpush1.msra.mxu0 0.0
      %635 = vmatprep.subr.mxu0 %v593
      %636 = vmatpush1.msra.mxu0 %v592
      %637 = vmatprep.subr.mxu0 %v591
      %638 = vmatpush1.msra.mxu0 %v590
      %639 = vmatprep.subr.mxu0 %v589
      %640 = vmatpush1.msra.mxu0 %v588
      %641 = vmatprep.subr.mxu0 %v587
      %642 = vmatpush1.msra.mxu0 %v586
      %643 = vmatprep.subr.mxu0 0.0
      %644 = vmatpush2.msra.mxu0 0.0
      %645 = vmatprep.subr.mxu0 0.0
      %646 = vmatpush2.msra.mxu0 0.0
      %647 = vmatprep.subr.mxu0 0.0
      %648 = vmatpush2.msra.mxu0 0.0
      %649 = vmatprep.subr.mxu0 0.0
      %650 = vmatpush2.msra.mxu0 0.0
      %651 = vmatprep.subr.mxu0 0.0
      %652 = vmatpush2.msra.mxu0 0.0
      %653 = vmatprep.subr.mxu0 0.0
      %654 = vmatpush2.msra.mxu0 0.0
      %655 = vmatprep.subr.mxu0 0.0
      %656 = vmatpush2.msra.mxu0 0.0
      %657 = vmatprep.subr.mxu0 0.0
      %658 = vmatpush2.msra.mxu0 0.0
      %659 = vmatprep.subr.mxu0 0.0
      %660 = vmatpush2.msra.mxu0 0.0
      %661 = vmatprep.subr.mxu0 0.0
      %662 = vmatpush2.msra.mxu0 0.0
      %663 = vmatprep.subr.mxu0 0.0
      %664 = vmatpush2.msra.mxu0 0.0
      %665 = vmatprep.subr.mxu0 0.0
      %666 = vmatpush2.msra.mxu0 0.0
      %667 = vmatprep.subr.mxu0 0.0
      %668 = vmatpush2.msra.mxu0 0.0
      %669 = vmatprep.subr.mxu0 0.0
      %670 = vmatpush2.msra.mxu0 0.0
      %671 = vmatprep.subr.mxu0 0.0
      %672 = vmatpush2.msra.mxu0 0.0
      %673 = vmatprep.subr.mxu0 0.0
      %674 = vmatpush2.msra.mxu0 0.0
      %675 = vmatprep.mubr.f32.mxu0 0.0
      %676 = vmatmul.mubr.f32.gmra.mxu0 %v606
      %v677 = vpop.f32.mrf.mxu0
      %v678 = vadd.f32 %v597, %v677
      %v679 = vpop.f32.mrf.mxu0
      %v680 = vadd.f32 %v597, %v679
      %681 = vmatprep.mubr.f32.mxu0 0.0
      %682 = vmatmul.mubr.f32.gmra.mxu0 %v609
      %v683 = vpop.f32.mrf.mxu0
      %v684 = vadd.f32 %v602, %v683
      %v685 = vpop.f32.mrf.mxu0
      %v686 = vadd.f32 %v602, %v685
      %687 = vdwg.mxu0
      %vm688 = vcmp.gt.f32.partialorder %v678, 0.0
      %vm689 = vcmp.gt.f32.partialorder %v680, 0.0
      %vm690 = vcmp.gt.f32.partialorder %v684, 0.0
      %vm691 = vcmp.gt.f32.partialorder %v686, 0.0
      %v692 = vmul.f32 %v678, 0.01
      %v693 = vmul.f32 %v680, 0.01
      %v694 = vmul.f32 %v684, 0.01
      %v695 = vmul.f32 %v686, 0.01
      %v696 = vsel %vm688, %v678, %v692
      %v697 = vsel %vm689, %v680, %v693
      %v698 = vsel %vm690, %v684, %v694
      %v699 = vsel %vm691, %v686, %v695
      %701 = vset.pattern.permute.xlu0 0
      %702 = vperm.xlu0 %701, %v353
      %v703 = vpop.permute.xlu0 %702
      %v706 = vsel %vm468, %v352, 0
      %708 = vmatprep.subr.mxu0 0.0
      %709 = vmatpush1.msra.mxu0 0.0
      %710 = vmatprep.subr.mxu0 0.0
      %711 = vmatpush1.msra.mxu0 0.0
      %712 = vmatprep.subr.mxu0 0.0
      %713 = vmatpush1.msra.mxu0 0.0
      %714 = vmatprep.subr.mxu0 0.0
      %715 = vmatpush1.msra.mxu0 0.0
      %716 = vmatprep.subr.mxu0 0.0
      %717 = vmatpush1.msra.mxu0 0.0
      %718 = vmatprep.subr.mxu0 0.0
      %719 = vmatpush1.msra.mxu0 0.0
      %720 = vmatprep.subr.mxu0 0.0
      %721 = vmatpush1.msra.mxu0 0.0
      %722 = vmatprep.subr.mxu0 0.0
      %723 = vmatpush1.msra.mxu0 0.0
      %724 = vmatprep.subr.mxu0 0.0
      %725 = vmatpush1.msra.mxu0 0.0
      %726 = vmatprep.subr.mxu0 0.0
      %727 = vmatpush1.msra.mxu0 0.0
      %728 = vmatprep.subr.mxu0 0.0
      %729 = vmatpush1.msra.mxu0 0.0
      %730 = vmatprep.subr.mxu0 0.0
      %731 = vmatpush1.msra.mxu0 0.0
      %732 = vmatprep.subr.mxu0 0.0
      %733 = vmatpush1.msra.mxu0 0.0
      %734 = vmatprep.subr.mxu0 0.0
      %735 = vmatpush1.msra.mxu0 0.0
      %736 = vmatprep.subr.mxu0 %v699
      %737 = vmatpush1.msra.mxu0 %v698
      %738 = vmatprep.subr.mxu0 %v697
      %739 = vmatpush1.msra.mxu0 %v696
      %740 = vmatprep.subr.mxu0 0.0
      %741 = vmatpush2.msra.mxu0 0.0
      %742 = vmatprep.subr.mxu0 0.0
      %743 = vmatpush2.msra.mxu0 0.0
      %744 = vmatprep.subr.mxu0 0.0
      %745 = vmatpush2.msra.mxu0 0.0
      %746 = vmatprep.subr.mxu0 0.0
      %747 = vmatpush2.msra.mxu0 0.0
      %748 = vmatprep.subr.mxu0 0.0
      %749 = vmatpush2.msra.mxu0 0.0
      %750 = vmatprep.subr.mxu0 0.0
      %751 = vmatpush2.msra.mxu0 0.0
      %752 = vmatprep.subr.mxu0 0.0
      %753 = vmatpush2.msra.mxu0 0.0
      %754 = vmatprep.subr.mxu0 0.0
      %755 = vmatpush2.msra.mxu0 0.0
      %756 = vmatprep.subr.mxu0 0.0
      %757 = vmatpush2.msra.mxu0 0.0
      %758 = vmatprep.subr.mxu0 0.0
      %759 = vmatpush2.msra.mxu0 0.0
      %760 = vmatprep.subr.mxu0 0.0
      %761 = vmatpush2.msra.mxu0 0.0
      %762 = vmatprep.subr.mxu0 0.0
      %763 = vmatpush2.msra.mxu0 0.0
      %764 = vmatprep.subr.mxu0 0.0
      %765 = vmatpush2.msra.mxu0 0.0
      %766 = vmatprep.subr.mxu0 0.0
      %767 = vmatpush2.msra.mxu0 0.0
      %768 = vmatprep.subr.mxu0 0.0
      %769 = vmatpush2.msra.mxu0 0.0
      %770 = vmatprep.subr.mxu0 0.0
      %771 = vmatpush2.msra.mxu0 0.0
      %772 = vmatprep.mubr.f32.mxu0 0.0
      %773 = vmatmul.mubr.f32.gmra.mxu0 %v706
      %v774 = vpop.f32.mrf.mxu0
      %v775 = vadd.f32 %v703, %v774
      %v776 = vpop.f32.mrf.mxu0
      %v777 = vadd.f32 %v703, %v776
      %778 = vdwg.mxu0
      %779 = vst [vmem:[%s334] sm:$0xff] %v775
      %780 = vst [vmem:[%s334 + $0x8] sm:$0xff] %v777
      %v781 = vld [vmem:[%s328 + $0x4] sm:$0xf]
      %v783 = vlaneseq
      %v784 = vshrl.u32 %v783, 7
      %v785 = vsub.s32 0, %v784
      %v786 = vrot.slane %v781, %v785
      %v787 = vlaneseq
      %v788 = vshrl.u32 %v787, 7
      %v789 = vsub.s32 2, %v788
      %v790 = vrot.slane %v781, %v789
      %v793 = vlaneseq
      %v794 = vshrl.u32 %v793, 7
      %v795 = vsub.s32 0, %v794
      %v796 = vrot.slane %v786, %v795
      %v797 = vlaneseq
      %v798 = vshrl.u32 %v797, 7
      %v799 = vsub.s32 0, %v798
      %v800 = vrot.slane %v790, %v799
      %v801 = vmul.f32 %v358, %v796
      %v802 = vmul.f32 %v358, %v800
      %v803 = vmul.f32 %v363, %v796
      %v804 = vmul.f32 %v363, %v800
      %v805 = vlaneseq
      %v806 = vshrl.u32 %v805, 7
      %v807 = vsub.s32 1, %v806
      %v808 = vrot.slane %v781, %v807
      %v809 = vlaneseq
      %v810 = vshrl.u32 %v809, 7
      %v811 = vsub.s32 3, %v810
      %v812 = vrot.slane %v781, %v811
      %v815 = vlaneseq
      %v816 = vshrl.u32 %v815, 7
      %v817 = vsub.s32 1, %v816
      %v818 = vrot.slane %v808, %v817
      %v819 = vlaneseq
      %v820 = vshrl.u32 %v819, 7
      %v821 = vsub.s32 1, %v820
      %v822 = vrot.slane %v812, %v821
      %v823 = vmul.f32 %v390, %v818
      %v824 = vmul.f32 %v390, %v822
      %v825 = vmul.f32 %v394, %v818
      %v826 = vmul.f32 %v394, %v822
      %v827 = vadd.f32 %v801, %v823
      %v828 = vadd.f32 %v802, %v824
      %v829 = vadd.f32 %v803, %v825
      %v830 = vadd.f32 %v804, %v826
      %v831 = vadd.f32 %v827, %v425
      %v832 = vadd.f32 %v828, %v425
      %v833 = vadd.f32 %v829, %v430
      %v834 = vadd.f32 %v830, %v430
      %vm835 = vcmp.gt.f32.partialorder %v831, 0.0
      %vm836 = vcmp.gt.f32.partialorder %v832, 0.0
      %vm837 = vcmp.gt.f32.partialorder %v833, 0.0
      %vm838 = vcmp.gt.f32.partialorder %v834, 0.0
      %v839 = vmul.f32 %v831, 0.01
      %v840 = vmul.f32 %v832, 0.01
      %v841 = vmul.f32 %v833, 0.01
      %v842 = vmul.f32 %v834, 0.01
      %v843 = vsel %vm835, %v831, %v839
      %v844 = vsel %vm836, %v832, %v840
      %v845 = vsel %vm837, %v833, %v841
      %v846 = vsel %vm838, %v834, %v842
      %847 = vmatprep.subr.mxu0 0.0
      %848 = vmatpush1.msra.mxu0 0.0
      %849 = vmatprep.subr.mxu0 0.0
      %850 = vmatpush1.msra.mxu0 0.0
      %851 = vmatprep.subr.mxu0 0.0
      %852 = vmatpush1.msra.mxu0 0.0
      %853 = vmatprep.subr.mxu0 0.0
      %854 = vmatpush1.msra.mxu0 0.0
      %855 = vmatprep.subr.mxu0 0.0
      %856 = vmatpush1.msra.mxu0 0.0
      %857 = vmatprep.subr.mxu0 0.0
      %858 = vmatpush1.msra.mxu0 0.0
      %859 = vmatprep.subr.mxu0 0.0
      %860 = vmatpush1.msra.mxu0 0.0
      %861 = vmatprep.subr.mxu0 0.0
      %862 = vmatpush1.msra.mxu0 0.0
      %863 = vmatprep.subr.mxu0 0.0
      %864 = vmatpush1.msra.mxu0 0.0
      %865 = vmatprep.subr.mxu0 0.0
      %866 = vmatpush1.msra.mxu0 0.0
      %867 = vmatprep.subr.mxu0 0.0
      %868 = vmatpush1.msra.mxu0 0.0
      %869 = vmatprep.subr.mxu0 0.0
      %870 = vmatpush1.msra.mxu0 0.0
      %871 = vmatprep.subr.mxu0 0.0
      %872 = vmatpush1.msra.mxu0 0.0
      %873 = vmatprep.subr.mxu0 0.0
      %874 = vmatpush1.msra.mxu0 0.0
      %875 = vmatprep.subr.mxu0 %v846
      %876 = vmatpush1.msra.mxu0 %v845
      %877 = vmatprep.subr.mxu0 %v844
      %878 = vmatpush1.msra.mxu0 %v843
      %879 = vmatprep.subr.mxu0 0.0
      %880 = vmatpush2.msra.mxu0 0.0
      %881 = vmatprep.subr.mxu0 0.0
      %882 = vmatpush2.msra.mxu0 0.0
      %883 = vmatprep.subr.mxu0 0.0
      %884 = vmatpush2.msra.mxu0 0.0
      %885 = vmatprep.subr.mxu0 0.0
      %886 = vmatpush2.msra.mxu0 0.0
      %887 = vmatprep.subr.mxu0 0.0
      %888 = vmatpush2.msra.mxu0 0.0
      %889 = vmatprep.subr.mxu0 0.0
      %890 = vmatpush2.msra.mxu0 0.0
      %891 = vmatprep.subr.mxu0 0.0
      %892 = vmatpush2.msra.mxu0 0.0
      %893 = vmatprep.subr.mxu0 0.0
      %894 = vmatpush2.msra.mxu0 0.0
      %895 = vmatprep.subr.mxu0 0.0
      %896 = vmatpush2.msra.mxu0 0.0
      %897 = vmatprep.subr.mxu0 0.0
      %898 = vmatpush2.msra.mxu0 0.0
      %899 = vmatprep.subr.mxu0 0.0
      %900 = vmatpush2.msra.mxu0 0.0
      %901 = vmatprep.subr.mxu0 0.0
      %902 = vmatpush2.msra.mxu0 0.0
      %903 = vmatprep.subr.mxu0 0.0
      %904 = vmatpush2.msra.mxu0 0.0
      %905 = vmatprep.subr.mxu0 0.0
      %906 = vmatpush2.msra.mxu0 0.0
      %907 = vmatprep.subr.mxu0 0.0
      %908 = vmatpush2.msra.mxu0 0.0
      %909 = vmatprep.subr.mxu0 0.0
      %910 = vmatpush2.msra.mxu0 0.0
      %911 = vmatprep.mubr.f32.mxu0 0.0
      %912 = vmatmul.mubr.f32.gmra.mxu0 %v470
      %v913 = vpop.f32.mrf.mxu0
      %v914 = vadd.f32 %v451, %v913
      %v915 = vpop.f32.mrf.mxu0
      %v916 = vadd.f32 %v451, %v915
      %917 = vmatprep.mubr.f32.mxu0 0.0
      %918 = vmatmul.mubr.f32.gmra.mxu0 %v473
      %v919 = vpop.f32.mrf.mxu0
      %v920 = vadd.f32 %v456, %v919
      %v921 = vpop.f32.mrf.mxu0
      %v922 = vadd.f32 %v456, %v921
      %923 = vmatprep.mubr.f32.mxu0 0.0
      %924 = vmatmul.mubr.f32.gmra.mxu0 %v476
      %v925 = vpop.f32.mrf.mxu0
      %v926 = vadd.f32 %v461, %v925
      %v927 = vpop.f32.mrf.mxu0
      %v928 = vadd.f32 %v461, %v927
      %929 = vmatprep.mubr.f32.mxu0 0.0
      %930 = vmatmul.mubr.f32.gmra.mxu0 %v479
      %v931 = vpop.f32.mrf.mxu0
      %v932 = vadd.f32 %v466, %v931
      %v933 = vpop.f32.mrf.mxu0
      %v934 = vadd.f32 %v466, %v933
      %935 = vdwg.mxu0
      %vm936 = vcmp.gt.f32.partialorder %v914, 0.0
      %vm937 = vcmp.gt.f32.partialorder %v916, 0.0
      %vm938 = vcmp.gt.f32.partialorder %v920, 0.0
      %vm939 = vcmp.gt.f32.partialorder %v922, 0.0
      %vm940 = vcmp.gt.f32.partialorder %v926, 0.0
      %vm941 = vcmp.gt.f32.partialorder %v928, 0.0
      %vm942 = vcmp.gt.f32.partialorder %v932, 0.0
      %vm943 = vcmp.gt.f32.partialorder %v934, 0.0
      %v944 = vmul.f32 %v914, 0.01
      %v945 = vmul.f32 %v916, 0.01
      %v946 = vmul.f32 %v920, 0.01
      %v947 = vmul.f32 %v922, 0.01
      %v948 = vmul.f32 %v926, 0.01
      %v949 = vmul.f32 %v928, 0.01
      %v950 = vmul.f32 %v932, 0.01
      %v951 = vmul.f32 %v934, 0.01
      %v952 = vsel %vm936, %v914, %v944
      %v953 = vsel %vm937, %v916, %v945
      %v954 = vsel %vm938, %v920, %v946
      %v955 = vsel %vm939, %v922, %v947
      %v956 = vsel %vm940, %v926, %v948
      %v957 = vsel %vm941, %v928, %v949
      %v958 = vsel %vm942, %v932, %v950
      %v959 = vsel %vm943, %v934, %v951
      %960 = vmatprep.subr.mxu0 0.0
      %961 = vmatpush1.msra.mxu0 0.0
      %962 = vmatprep.subr.mxu0 0.0
      %963 = vmatpush1.msra.mxu0 0.0
      %964 = vmatprep.subr.mxu0 0.0
      %965 = vmatpush1.msra.mxu0 0.0
      %966 = vmatprep.subr.mxu0 0.0
      %967 = vmatpush1.msra.mxu0 0.0
      %968 = vmatprep.subr.mxu0 0.0
      %969 = vmatpush1.msra.mxu0 0.0
      %970 = vmatprep.subr.mxu0 0.0
      %971 = vmatpush1.msra.mxu0 0.0
      %972 = vmatprep.subr.mxu0 0.0
      %973 = vmatpush1.msra.mxu0 0.0
      %974 = vmatprep.subr.mxu0 0.0
      %975 = vmatpush1.msra.mxu0 0.0
      %976 = vmatprep.subr.mxu0 0.0
      %977 = vmatpush1.msra.mxu0 0.0
      %978 = vmatprep.subr.mxu0 0.0
      %979 = vmatpush1.msra.mxu0 0.0
      %980 = vmatprep.subr.mxu0 0.0
      %981 = vmatpush1.msra.mxu0 0.0
      %982 = vmatprep.subr.mxu0 0.0
      %983 = vmatpush1.msra.mxu0 0.0
      %984 = vmatprep.subr.mxu0 %v959
      %985 = vmatpush1.msra.mxu0 %v958
      %986 = vmatprep.subr.mxu0 %v957
      %987 = vmatpush1.msra.mxu0 %v956
      %988 = vmatprep.subr.mxu0 %v955
      %989 = vmatpush1.msra.mxu0 %v954
      %990 = vmatprep.subr.mxu0 %v953
      %991 = vmatpush1.msra.mxu0 %v952
      %992 = vmatprep.subr.mxu0 0.0
      %993 = vmatpush2.msra.mxu0 0.0
      %994 = vmatprep.subr.mxu0 0.0
      %995 = vmatpush2.msra.mxu0 0.0
      %996 = vmatprep.subr.mxu0 0.0
      %997 = vmatpush2.msra.mxu0 0.0
      %998 = vmatprep.subr.mxu0 0.0
      %999 = vmatpush2.msra.mxu0 0.0
      %1000 = vmatprep.subr.mxu0 0.0
      %1001 = vmatpush2.msra.mxu0 0.0
      %1002 = vmatprep.subr.mxu0 0.0
      %1003 = vmatpush2.msra.mxu0 0.0
      %1004 = vmatprep.subr.mxu0 0.0
      %1005 = vmatpush2.msra.mxu0 0.0
      %1006 = vmatprep.subr.mxu0 0.0
      %1007 = vmatpush2.msra.mxu0 0.0
      %1008 = vmatprep.subr.mxu0 0.0
      %1009 = vmatpush2.msra.mxu0 0.0
      %1010 = vmatprep.subr.mxu0 0.0
      %1011 = vmatpush2.msra.mxu0 0.0
      %1012 = vmatprep.subr.mxu0 0.0
      %1013 = vmatpush2.msra.mxu0 0.0
      %1014 = vmatprep.subr.mxu0 0.0
      %1015 = vmatpush2.msra.mxu0 0.0
      %1016 = vmatprep.subr.mxu0 0.0
      %1017 = vmatpush2.msra.mxu0 0.0
      %1018 = vmatprep.subr.mxu0 0.0
      %1019 = vmatpush2.msra.mxu0 0.0
      %1020 = vmatprep.subr.mxu0 0.0
      %1021 = vmatpush2.msra.mxu0 0.0
      %1022 = vmatprep.subr.mxu0 0.0
      %1023 = vmatpush2.msra.mxu0 0.0
      %1024 = vmatprep.mubr.f32.mxu0 0.0
      %1025 = vmatmul.mubr.f32.gmra.mxu0 %v606
      %v1026 = vpop.f32.mrf.mxu0
      %v1027 = vadd.f32 %v597, %v1026
      %v1028 = vpop.f32.mrf.mxu0
      %v1029 = vadd.f32 %v597, %v1028
      %1030 = vmatprep.mubr.f32.mxu0 0.0
      %1031 = vmatmul.mubr.f32.gmra.mxu0 %v609
      %v1032 = vpop.f32.mrf.mxu0
      %v1033 = vadd.f32 %v602, %v1032
      %v1034 = vpop.f32.mrf.mxu0
      %v1035 = vadd.f32 %v602, %v1034
      %1036 = vdwg.mxu0
      %vm1037 = vcmp.gt.f32.partialorder %v1027, 0.0
      %vm1038 = vcmp.gt.f32.partialorder %v1029, 0.0
      %vm1039 = vcmp.gt.f32.partialorder %v1033, 0.0
      %vm1040 = vcmp.gt.f32.partialorder %v1035, 0.0
      %v1041 = vmul.f32 %v1027, 0.01
      %v1042 = vmul.f32 %v1029, 0.01
      %v1043 = vmul.f32 %v1033, 0.01
      %v1044 = vmul.f32 %v1035, 0.01
      %v1045 = vsel %vm1037, %v1027, %v1041
      %v1046 = vsel %vm1038, %v1029, %v1042
      %v1047 = vsel %vm1039, %v1033, %v1043
      %v1048 = vsel %vm1040, %v1035, %v1044
      %1049 = vmatprep.subr.mxu0 0.0
      %1050 = vmatpush1.msra.mxu0 0.0
      %1051 = vmatprep.subr.mxu0 0.0
      %1052 = vmatpush1.msra.mxu0 0.0
      %1053 = vmatprep.subr.mxu0 0.0
      %1054 = vmatpush1.msra.mxu0 0.0
      %1055 = vmatprep.subr.mxu0 0.0
      %1056 = vmatpush1.msra.mxu0 0.0
      %1057 = vmatprep.subr.mxu0 0.0
      %1058 = vmatpush1.msra.mxu0 0.0
      %1059 = vmatprep.subr.mxu0 0.0
      %1060 = vmatpush1.msra.mxu0 0.0
      %1061 = vmatprep.subr.mxu0 0.0
      %1062 = vmatpush1.msra.mxu0 0.0
      %1063 = vmatprep.subr.mxu0 0.0
      %1064 = vmatpush1.msra.mxu0 0.0
      %1065 = vmatprep.subr.mxu0 0.0
      %1066 = vmatpush1.msra.mxu0 0.0
      %1067 = vmatprep.subr.mxu0 0.0
      %1068 = vmatpush1.msra.mxu0 0.0
      %1069 = vmatprep.subr.mxu0 0.0
      %1070 = vmatpush1.msra.mxu0 0.0
      %1071 = vmatprep.subr.mxu0 0.0
      %1072 = vmatpush1.msra.mxu0 0.0
      %1073 = vmatprep.subr.mxu0 0.0
      %1074 = vmatpush1.msra.mxu0 0.0
      %1075 = vmatprep.subr.mxu0 0.0
      %1076 = vmatpush1.msra.mxu0 0.0
      %1077 = vmatprep.subr.mxu0 %v1048
      %1078 = vmatpush1.msra.mxu0 %v1047
      %1079 = vmatprep.subr.mxu0 %v1046
      %1080 = vmatpush1.msra.mxu0 %v1045
      %1081 = vmatprep.subr.mxu0 0.0
      %1082 = vmatpush2.msra.mxu0 0.0
      %1083 = vmatprep.subr.mxu0 0.0
      %1084 = vmatpush2.msra.mxu0 0.0
      %1085 = vmatprep.subr.mxu0 0.0
      %1086 = vmatpush2.msra.mxu0 0.0
      %1087 = vmatprep.subr.mxu0 0.0
      %1088 = vmatpush2.msra.mxu0 0.0
      %1089 = vmatprep.subr.mxu0 0.0
      %1090 = vmatpush2.msra.mxu0 0.0
      %1091 = vmatprep.subr.mxu0 0.0
      %1092 = vmatpush2.msra.mxu0 0.0
      %1093 = vmatprep.subr.mxu0 0.0
      %1094 = vmatpush2.msra.mxu0 0.0
      %1095 = vmatprep.subr.mxu0 0.0
      %1096 = vmatpush2.msra.mxu0 0.0
      %1097 = vmatprep.subr.mxu0 0.0
      %1098 = vmatpush2.msra.mxu0 0.0
      %1099 = vmatprep.subr.mxu0 0.0
      %1100 = vmatpush2.msra.mxu0 0.0
      %1101 = vmatprep.subr.mxu0 0.0
      %1102 = vmatpush2.msra.mxu0 0.0
      %1103 = vmatprep.subr.mxu0 0.0
      %1104 = vmatpush2.msra.mxu0 0.0
      %1105 = vmatprep.subr.mxu0 0.0
      %1106 = vmatpush2.msra.mxu0 0.0
      %1107 = vmatprep.subr.mxu0 0.0
      %1108 = vmatpush2.msra.mxu0 0.0
      %1109 = vmatprep.subr.mxu0 0.0
      %1110 = vmatpush2.msra.mxu0 0.0
      %1111 = vmatprep.subr.mxu0 0.0
      %1112 = vmatpush2.msra.mxu0 0.0
      %1113 = vmatprep.mubr.f32.mxu0 0.0
      %1114 = vmatmul.mubr.f32.gmra.mxu0 %v706
      %v1115 = vpop.f32.mrf.mxu0
      %v1116 = vadd.f32 %v703, %v1115
      %v1117 = vpop.f32.mrf.mxu0
      %v1118 = vadd.f32 %v703, %v1117
      %1119 = vdwg.mxu0
      %1120 = vst [vmem:[%s334 + $0x10] sm:$0xff] %v1116
      %1121 = vst [vmem:[%s334 + $0x18] sm:$0xff] %v1118
      %s1122 = smul.u32 4, %s20
      %p1123 = scmp.lt.s32.totalorder %s1122, 7
      %s1124 = scalar_select %p1123, %s1122, 7
      %s1125 = smul.addr %s1124, 8
      %s1126 = scalar_lea.vmem %s9, %s1125
      // Predicated region
      $region57: #{pca_to_latent_forward.1} parent=55 // pred_check
        %p1127 = pneg %p232
      $region58: #{pca_to_latent_forward.1} parent=55 // pred_check_branch
        %1129 = sbr.rel (%p1127) target = $region60
      $region59: #{pca_to_latent_forward.1} parent=55 // pred_region
        %s1130 = smul.u32 4, %s20
      $region60: #{pca_to_latent_forward.1} parent=55 // pred_fallthru
        _
    $region56: #{pca_to_latent_forward.1} parent=5 // pred_fallthru
      _
    %p1131 = scmp.le.s32.totalorder 2, %s15
    // Predicated region
    $region61: #{pca_to_latent_forward.1} parent=5 // pred_check
      %p1132 = pneg %p1131
    $region62: #{pca_to_latent_forward.1} parent=5 // pred_check_branch
      %1134 = sbr.rel (%p1132) target = $region64
    $region63: #{pca_to_latent_forward.1} parent=5 // pred_region
      %s1135 = ssub.s32 %s15, 2
      // Predicated region
      $region65: #{pca_to_latent_forward.1} parent=63 // pred_check
        %p1136 = pneg %p238
      $region66: #{pca_to_latent_forward.1} parent=63 // pred_check_branch
        %1138 = sbr.rel (%p1136) target = $region68
      $region67: #{pca_to_latent_forward.1} parent=63 // pred_region
        %s1139 = smul.u32 4, %s21
        %p1140 = scmp.lt.s32.totalorder %s1139, 7
        %s1141 = scalar_select %p1140, %s1139, 7
        %s1142 = smul.addr %s1141, 8
        %s1143 = scalar_lea.vmem %s9, %s1142
      $region68: #{pca_to_latent_forward.1} parent=63 // pred_fallthru
        _
    $region64: #{pca_to_latent_forward.1} parent=5 // pred_fallthru
      _
  $region6: #{pca_to_latent_forward.1} parent=0 // loop_footer
    %s19 = sadd.s32 1, %s15
  $region7: #{pca_to_latent_forward.1} parent=0 // loop_footer_branch
    %14 = sbr.rel target = $region3
  $region8: #{pca_to_latent_forward.1} parent=0 // loop_exit
    _

</llo_original>
